<compile_context>
chip_gen: v7x
topology: tpu7x:2x2x1
jax: 0.10.0
libtpu: 0.0.40
codegen_flags: <defaults>
</compile_context>

<pallas_src>
import jax
import jax.numpy as jnp
from jax.experimental import pallas as pl
from jax.experimental.pallas import tpu as pltpu


def _sum_to_lane_row(x):
    """Sum a (..., W) array over all leading axes -> (1, W) lane-shaped partial."""
    while x.ndim > 2:
        x = jnp.sum(x, axis=0)
    return jnp.sum(x, axis=0, keepdims=True)


def _inpainting_loss_kernel(imgs_ref, pred_ref, mask_ref, out_ref):
    imgs = imgs_ref[...]                              # (BB, C, H, W)
    pred = pred_ref[...]
    mask = mask_ref[...]
    BB, C, H, W = imgs.shape
    f32 = jnp.float32

    diff = pred - imgs
    ad = jnp.abs(diff)
    inv = 1.0 - mask                                  # hole mask (>= 0)

    # Masked L1 partial sums, reduced over (BB, C, H); lane (W) axis kept.
    # valid = total - hole is exact because mask + inv == 1.
    hole_row = _sum_to_lane_row(inv * ad)             # (1, W)
    total_row = _sum_to_lane_row(ad)                  # (1, W)
    valid_row = total_row - hole_row

    # Composite image (reuses diff; exact for binary masks).
    comp = imgs + inv * diff                          # (BB, C, H, W)

    # ---- all-ones 3x3 dilation conv == zero-padded 3x3 box-sum of the
    # channel-summed hole mask, via O(HW) roll shift-adds ---------------------
    s = jnp.sum(inv, axis=1)                          # (BB, H, W)
    row = jax.lax.broadcasted_iota(jnp.int32, (BB, H, W), 1)
    col = jax.lax.broadcasted_iota(jnp.int32, (BB, H, W), 2)

    up = jnp.where(row >= 1, pltpu.roll(s, 1, axis=1), 0.0)           # s[i-1, j]
    dn = jnp.where(row <= H - 2, pltpu.roll(s, H - 1, axis=1), 0.0)   # s[i+1, j]
    r3 = s + up + dn
    lf = jnp.where(col >= 1, pltpu.roll(r3, 1, axis=2), 0.0)          # r3[i, j-1]
    rt = jnp.where(col <= W - 2, pltpu.roll(r3, W - 1, axis=2), 0.0)  # r3[i, j+1]
    box = r3 + lf + rt
    # box accumulates small non-negative integers exactly in f32, so the != 0
    # test matches the reference (conv_output != 0) bit-for-bit.
    dil = (box != 0.0).astype(f32)                    # dilated holes (BB, H, W)

    # ---- TV column term (channel-factored, rolls instead of W-1 slices) -----
    cnext = pltpu.roll(comp, W - 1, axis=3)           # comp[..., j+1] (wraps at W-1)
    adcol = jnp.sum(jnp.abs(cnext - comp), axis=1)    # (BB, H, W)
    dnext = pltpu.roll(dil, W - 1, axis=2)            # dil[..., j+1]
    col_row = _sum_to_lane_row(
        jnp.where(col <= W - 2, dnext * dil * adcol, 0.0))            # (1, W)

    # ---- TV row term (reference quirk: first row minus last row, broadcast
    # over the H-1 row pairs) --------------------------------------------------
    dbelow = pltpu.roll(dil, H - 1, axis=1)           # dil[:, i+1, :]
    rowcount = jnp.sum(jnp.where(row <= H - 2, dbelow * dil, 0.0),
                       axis=1, keepdims=True)         # (BB, 1, W)
    adrow = jnp.sum(jnp.abs(comp[:, :, 0:1, :] - comp[:, :, H - 1:H, :]),
                    axis=1)                           # (BB, 1, W)
    row_row = _sum_to_lane_row(rowcount * adrow)      # (1, W)

    # ---- single (1, 4, W) store of the four lane-shaped partials ------------
    sub = jax.lax.broadcasted_iota(jnp.int32, (4, W), 0)
    out4 = (jnp.where(sub == 0, hole_row, 0.0)
            + jnp.where(sub == 1, valid_row, 0.0)
            + jnp.where(sub == 2, col_row, 0.0)
            + jnp.where(sub == 3, row_row, 0.0))
    out_ref[...] = out4.reshape(1, 4, W)


def _l1_kernel(imgs_ref, pred_ref, out_ref):
    ad = jnp.abs(pred_ref[...] - imgs_ref[...])       # (BB, C, H, W)
    W = ad.shape[-1]
    out_ref[...] = _sum_to_lane_row(ad).reshape(1, 1, W)


_FALLBACK_VMEM_LIMIT = 32 * 1024 * 1024


def _vmem_limit_bytes():
    """Generation-aware scoped-VMEM limit (~3/4 of physical, capped at 96 MiB)."""
    try:
        cap = getattr(pltpu.get_tpu_info(), "vmem_capacity_bytes", None)
        if cap:
            return int(min(cap * 3 // 4, 96 * 1024 * 1024))
    except Exception:
        pass
    return _FALLBACK_VMEM_LIMIT


def _pick_block_batch(batch, item_bytes, vmem_limit):
    """Largest divisor BB of `batch` whose (BB, C, H, W) block stays under a
    generation-aware target, while keeping >= 2 grid steps (v7x megacore)."""
    target = max(vmem_limit // 24, 1024 * 1024)
    best = 1
    for bb in range(1, batch + 1):
        if batch % bb == 0 and bb * item_bytes <= target:
            best = bb
    if batch >= 2:
        while best > 1 and batch // best < 2:
            best -= 1
            while best > 1 and batch % best:
                best -= 1
    return max(best, 1)


def _check_block_fits(block_bytes, vmem_limit):
    # 3 double-buffered inputs (6 blocks) + ~6 block-sized kernel temporaries.
    est = 12 * block_bytes
    if est > vmem_limit:
        # TODO(synk): add an H-tiled path (1-row halo for the 3x3 dilation,
        # accumulators finalized with pl.when) for images whose (1, C, H, W)
        # block no longer fits in VMEM (e.g. >= 768^2 f32 on v7x).
        raise ValueError(
            f"InpaintingLoss block needs ~{est / 2**20:.1f} MiB of VMEM but the "
            f"limit is {vmem_limit / 2**20:.1f} MiB; image too large for the "
            "un-tiled path.")


def inpainting_loss(imgs, pred, mask=None):
    imgs = imgs.astype(jnp.float32)
    pred = pred.astype(jnp.float32)
    B, C, H, W = imgs.shape

    vmem_limit = _vmem_limit_bytes()
    item_bytes = C * H * W * 4
    bb = _pick_block_batch(B, item_bytes, vmem_limit)
    _check_block_fits(bb * item_bytes, vmem_limit)
    grid = (B // bb,)

    img_spec = pl.BlockSpec((bb, C, H, W), lambda g: (g, 0, 0, 0))
    params = pltpu.CompilerParams(
        dimension_semantics=("parallel",),            # batch blocks independent
        vmem_limit_bytes=vmem_limit)

    if mask is None:
        partials = pl.pallas_call(
            _l1_kernel,
            out_shape=jax.ShapeDtypeStruct((B // bb, 1, W), jnp.float32),
            grid=grid,
            in_specs=[img_spec, img_spec],
            out_specs=pl.BlockSpec((1, 1, W), lambda g: (g, 0, 0)),
            compiler_params=params,
        )(imgs, pred)
        return jnp.sum(partials) / (B * C * H * W)

    mask = mask.astype(jnp.float32)
    partials = pl.pallas_call(
        _inpainting_loss_kernel,
        out_shape=jax.ShapeDtypeStruct((B // bb, 4, W), jnp.float32),
        grid=grid,
        in_specs=[img_spec, img_spec, img_spec],
        out_specs=pl.BlockSpec((1, 4, W), lambda g: (g, 0, 0)),
        compiler_params=params,
    )(imgs, pred, mask)

    n_px = B * C * H * W
    hole_loss = jnp.sum(partials[:, 0, :]) / n_px
    valid_loss = jnp.sum(partials[:, 1, :]) / n_px
    tv_col = jnp.sum(partials[:, 2, :]) / (B * C * H * (W - 1))
    tv_row = jnp.sum(partials[:, 3, :]) / (B * C * (H - 1) * W)
    return valid_loss + hole_loss * 6.0 + (tv_col + tv_row) * 0.1


def _reference_loss(imgs, pred, mask):
    """Pure-JAX port of the PyTorch module, for verification."""
    B, C, H, W = imgs.shape
    comp = mask * imgs + (1.0 - mask) * pred
    hole_mask = 1.0 - mask
    w = jnp.ones((C, C, 3, 3), jnp.float32)
    conv = jax.lax.conv_general_dilated(
        hole_mask, w, window_strides=(1, 1), padding=((1, 1), (1, 1)),
        dimension_numbers=("NCHW", "OIHW", "NCHW"))
    dil = (conv != 0.0).astype(jnp.float32)
    cols = dil[:, :, :, 1:] * dil[:, :, :, :-1]
    rows = dil[:, :, 1:, :] * dil[:, :, :-1, :]
    tv = (jnp.mean(jnp.abs(cols * (comp[:, :, :, 1:] - comp[:, :, :, :-1])))
          + jnp.mean(jnp.abs(rows * (comp[:, :, :1, :] - comp[:, :, -1:, :]))))
    hole = jnp.mean(jnp.abs((1.0 - mask) * pred - (1.0 - mask) * imgs))
    valid = jnp.mean(jnp.abs(mask * pred - mask * imgs))
    return valid + hole * 6.0 + tv * 0.1


if __name__ == "__main__":
    key = jax.random.PRNGKey(0)
    k_img, k_pred, k_mask = jax.random.split(key, 3)
    B, C, H, W = 2, 4, 16, 16
    imgs = jax.random.normal(k_img, (B, C, H, W), dtype=jnp.float32)
    pred = jax.random.normal(k_pred, (B, C, H, W), dtype=jnp.float32)
    # binary mask: 1 = valid pixel, 0 = hole
    mask = (jax.random.uniform(k_mask, (B, C, H, W)) > 0.3).astype(jnp.float32)

    loss = jax.block_until_ready(inpainting_loss(imgs, pred, mask))
    ref = jax.block_until_ready(_reference_loss(imgs, pred, mask))
    assert jnp.allclose(loss, ref, rtol=1e-5, atol=1e-5), (loss, ref)

    l1 = jax.block_until_ready(inpainting_loss(imgs, pred, None))
    l1_ref = jnp.mean(jnp.abs(imgs - pred))
    assert jnp.allclose(l1, l1_ref, rtol=1e-5, atol=1e-6), (l1, l1_ref)

    print("KERNEL_OK")
</pallas_src>

<mosaic_0001>
module attributes {stable_mosaic.version = 11 : i64} {
  func.func @_inpainting_loss_kernel(%arg0: i32, %arg1: memref<1x4x16x16xf32, #tpu.memory_space<vmem>>, %arg2: memref<1x4x16x16xf32, #tpu.memory_space<vmem>>, %arg3: memref<1x4x16x16xf32, #tpu.memory_space<vmem>>, %arg4: memref<1x4x16xf32, #tpu.memory_space<vmem>>) attributes {dimension_semantics = [#tpu.dimension_semantics<parallel>], iteration_bounds = array<i64: 2>, scalar_prefetch = 0 : i64, scratch_operands = 0 : i64, tpu.core_type = #tpu.core_type<tc>, window_params = [{transform_indices = @transform_0, window_bounds = array<i64: 1, 4, 16, 16>}, {transform_indices = @transform_1, window_bounds = array<i64: 1, 4, 16, 16>}, {transform_indices = @transform_2, window_bounds = array<i64: 1, 4, 16, 16>}, {transform_indices = @transform_3, window_bounds = array<i64: 1, 4, 16>}]} {
    %c0 = arith.constant 0 : index
    %c0_0 = arith.constant 0 : index
    %c0_1 = arith.constant 0 : index
    %c0_2 = arith.constant 0 : index
    %0 = vector.load %arg1[%c0, %c0_0, %c0_1, %c0_2] : memref<1x4x16x16xf32, #tpu.memory_space<vmem>>, vector<1x4x16x16xf32>
    %c0_3 = arith.constant 0 : index
    %c0_4 = arith.constant 0 : index
    %c0_5 = arith.constant 0 : index
    %c0_6 = arith.constant 0 : index
    %1 = vector.load %arg2[%c0_3, %c0_4, %c0_5, %c0_6] : memref<1x4x16x16xf32, #tpu.memory_space<vmem>>, vector<1x4x16x16xf32>
    %c0_7 = arith.constant 0 : index
    %c0_8 = arith.constant 0 : index
    %c0_9 = arith.constant 0 : index
    %c0_10 = arith.constant 0 : index
    %2 = vector.load %arg3[%c0_7, %c0_8, %c0_9, %c0_10] : memref<1x4x16x16xf32, #tpu.memory_space<vmem>>, vector<1x4x16x16xf32>
    %3 = arith.subf %1, %0 : vector<1x4x16x16xf32>
    %4 = math.absf %3 : vector<1x4x16x16xf32>
    %cst = arith.constant 1.000000e+00 : f32
    %5 = vector.broadcast %cst : f32 to vector<1x4x16x16xf32>
    %6 = arith.subf %5, %2 : vector<1x4x16x16xf32>
    %7 = arith.mulf %6, %4 : vector<1x4x16x16xf32>
    %cst_11 = arith.constant dense<0.000000e+00> : vector<4x16x16xf32>
    %8 = vector.multi_reduction <add>, %7, %cst_11 [0] : vector<1x4x16x16xf32> to vector<4x16x16xf32>
    %cst_12 = arith.constant dense<0.000000e+00> : vector<16x16xf32>
    %9 = vector.multi_reduction <add>, %8, %cst_12 [0] : vector<4x16x16xf32> to vector<16x16xf32>
    %cst_13 = arith.constant dense<0.000000e+00> : vector<16xf32>
    %10 = vector.multi_reduction <add>, %9, %cst_13 [0] : vector<16x16xf32> to vector<16xf32>
    %11 = vector.shape_cast %10 : vector<16xf32> to vector<1x16xf32>
    %cst_14 = arith.constant dense<0.000000e+00> : vector<4x16x16xf32>
    %12 = vector.multi_reduction <add>, %4, %cst_14 [0] : vector<1x4x16x16xf32> to vector<4x16x16xf32>
    %cst_15 = arith.constant dense<0.000000e+00> : vector<16x16xf32>
    %13 = vector.multi_reduction <add>, %12, %cst_15 [0] : vector<4x16x16xf32> to vector<16x16xf32>
    %cst_16 = arith.constant dense<0.000000e+00> : vector<16xf32>
    %14 = vector.multi_reduction <add>, %13, %cst_16 [0] : vector<16x16xf32> to vector<16xf32>
    %15 = vector.shape_cast %14 : vector<16xf32> to vector<1x16xf32>
    %16 = arith.subf %15, %11 : vector<1x16xf32>
    %17 = arith.mulf %6, %3 : vector<1x4x16x16xf32>
    %18 = arith.addf %0, %17 : vector<1x4x16x16xf32>
    %cst_17 = arith.constant dense<0.000000e+00> : vector<1x16x16xf32>
    %19 = vector.multi_reduction <add>, %6, %cst_17 [1] : vector<1x4x16x16xf32> to vector<1x16x16xf32>
    %20 = tpu.iota {dimensions = array<i32: 1>} : vector<1x16x16xi32>
    %21 = tpu.iota {dimensions = array<i32: 2>} : vector<1x16x16xi32>
    %c1_i32 = arith.constant 1 : i32
    %22 = vector.broadcast %c1_i32 : i32 to vector<1x16x16xi32>
    %23 = arith.cmpi sge, %20, %22 : vector<1x16x16xi32>
    %c1_i32_18 = arith.constant 1 : i32
    %24 = tpu.dynamic_rotate %19 by %c1_i32_18 dim 1 : vector<1x16x16xf32>, i32 -> vector<1x16x16xf32>
    %cst_19 = arith.constant 0.000000e+00 : f32
    %25 = vector.broadcast %cst_19 : f32 to vector<1x16x16xf32>
    %26 = arith.select %23, %24, %25 : vector<1x16x16xi1>, vector<1x16x16xf32>
    %c14_i32 = arith.constant 14 : i32
    %27 = vector.broadcast %c14_i32 : i32 to vector<1x16x16xi32>
    %28 = arith.cmpi sle, %20, %27 : vector<1x16x16xi32>
    %c15_i32 = arith.constant 15 : i32
    %29 = tpu.dynamic_rotate %19 by %c15_i32 dim 1 : vector<1x16x16xf32>, i32 -> vector<1x16x16xf32>
    %cst_20 = arith.constant 0.000000e+00 : f32
    %30 = vector.broadcast %cst_20 : f32 to vector<1x16x16xf32>
    %31 = arith.select %28, %29, %30 : vector<1x16x16xi1>, vector<1x16x16xf32>
    %32 = arith.addf %19, %26 : vector<1x16x16xf32>
    %33 = arith.addf %32, %31 : vector<1x16x16xf32>
    %c1_i32_21 = arith.constant 1 : i32
    %34 = vector.broadcast %c1_i32_21 : i32 to vector<1x16x16xi32>
    %35 = arith.cmpi sge, %21, %34 : vector<1x16x16xi32>
    %c1_i32_22 = arith.constant 1 : i32
    %36 = tpu.dynamic_rotate %33 by %c1_i32_22 dim 2 : vector<1x16x16xf32>, i32 -> vector<1x16x16xf32>
    %cst_23 = arith.constant 0.000000e+00 : f32
    %37 = vector.broadcast %cst_23 : f32 to vector<1x16x16xf32>
    %38 = arith.select %35, %36, %37 : vector<1x16x16xi1>, vector<1x16x16xf32>
    %c14_i32_24 = arith.constant 14 : i32
    %39 = vector.broadcast %c14_i32_24 : i32 to vector<1x16x16xi32>
    %40 = arith.cmpi sle, %21, %39 : vector<1x16x16xi32>
    %c15_i32_25 = arith.constant 15 : i32
    %41 = tpu.dynamic_rotate %33 by %c15_i32_25 dim 2 : vector<1x16x16xf32>, i32 -> vector<1x16x16xf32>
    %cst_26 = arith.constant 0.000000e+00 : f32
    %42 = vector.broadcast %cst_26 : f32 to vector<1x16x16xf32>
    %43 = arith.select %40, %41, %42 : vector<1x16x16xi1>, vector<1x16x16xf32>
    %44 = arith.addf %33, %38 : vector<1x16x16xf32>
    %45 = arith.addf %44, %43 : vector<1x16x16xf32>
    %cst_27 = arith.constant 0.000000e+00 : f32
    %46 = vector.broadcast %cst_27 : f32 to vector<1x16x16xf32>
    %47 = arith.cmpf one, %45, %46 : vector<1x16x16xf32>
    %48 = arith.extui %47 : vector<1x16x16xi1> to vector<1x16x16xi32>
    %49 = arith.sitofp %48 : vector<1x16x16xi32> to vector<1x16x16xf32>
    %c15_i32_28 = arith.constant 15 : i32
    %50 = tpu.dynamic_rotate %18 by %c15_i32_28 dim 3 : vector<1x4x16x16xf32>, i32 -> vector<1x4x16x16xf32>
    %51 = arith.subf %50, %18 : vector<1x4x16x16xf32>
    %52 = math.absf %51 : vector<1x4x16x16xf32>
    %cst_29 = arith.constant dense<0.000000e+00> : vector<1x16x16xf32>
    %53 = vector.multi_reduction <add>, %52, %cst_29 [1] : vector<1x4x16x16xf32> to vector<1x16x16xf32>
    %c15_i32_30 = arith.constant 15 : i32
    %54 = tpu.dynamic_rotate %49 by %c15_i32_30 dim 2 : vector<1x16x16xf32>, i32 -> vector<1x16x16xf32>
    %c14_i32_31 = arith.constant 14 : i32
    %55 = vector.broadcast %c14_i32_31 : i32 to vector<1x16x16xi32>
    %56 = arith.cmpi sle, %21, %55 : vector<1x16x16xi32>
    %57 = arith.mulf %54, %49 : vector<1x16x16xf32>
    %58 = arith.mulf %57, %53 : vector<1x16x16xf32>
    %cst_32 = arith.constant 0.000000e+00 : f32
    %59 = vector.broadcast %cst_32 : f32 to vector<1x16x16xf32>
    %60 = arith.select %56, %58, %59 : vector<1x16x16xi1>, vector<1x16x16xf32>
    %cst_33 = arith.constant dense<0.000000e+00> : vector<16x16xf32>
    %61 = vector.multi_reduction <add>, %60, %cst_33 [0] : vector<1x16x16xf32> to vector<16x16xf32>
    %cst_34 = arith.constant dense<0.000000e+00> : vector<16xf32>
    %62 = vector.multi_reduction <add>, %61, %cst_34 [0] : vector<16x16xf32> to vector<16xf32>
    %63 = vector.shape_cast %62 : vector<16xf32> to vector<1x16xf32>
    %c15_i32_35 = arith.constant 15 : i32
    %64 = tpu.dynamic_rotate %49 by %c15_i32_35 dim 1 : vector<1x16x16xf32>, i32 -> vector<1x16x16xf32>
    %c14_i32_36 = arith.constant 14 : i32
    %65 = vector.broadcast %c14_i32_36 : i32 to vector<1x16x16xi32>
    %66 = arith.cmpi sle, %20, %65 : vector<1x16x16xi32>
    %67 = arith.mulf %64, %49 : vector<1x16x16xf32>
    %cst_37 = arith.constant 0.000000e+00 : f32
    %68 = vector.broadcast %cst_37 : f32 to vector<1x16x16xf32>
    %69 = arith.select %66, %67, %68 : vector<1x16x16xi1>, vector<1x16x16xf32>
    %cst_38 = arith.constant dense<0.000000e+00> : vector<1x16xf32>
    %70 = vector.multi_reduction <add>, %69, %cst_38 [1] : vector<1x16x16xf32> to vector<1x16xf32>
    %71 = vector.shape_cast %70 : vector<1x16xf32> to vector<1x1x16xf32>
    %72 = vector.extract_strided_slice %18 {offsets = [0, 0, 0, 0], sizes = [1, 4, 1, 16], strides = [1, 1, 1, 1]} : vector<1x4x16x16xf32> to vector<1x4x1x16xf32>
    %73 = vector.extract_strided_slice %18 {offsets = [0, 0, 15, 0], sizes = [1, 4, 1, 16], strides = [1, 1, 1, 1]} : vector<1x4x16x16xf32> to vector<1x4x1x16xf32>
    %74 = arith.subf %72, %73 : vector<1x4x1x16xf32>
    %75 = math.absf %74 : vector<1x4x1x16xf32>
    %cst_39 = arith.constant dense<0.000000e+00> : vector<1x1x16xf32>
    %76 = vector.multi_reduction <add>, %75, %cst_39 [1] : vector<1x4x1x16xf32> to vector<1x1x16xf32>
    %77 = arith.mulf %71, %76 : vector<1x1x16xf32>
    %cst_40 = arith.constant dense<0.000000e+00> : vector<1x16xf32>
    %78 = vector.multi_reduction <add>, %77, %cst_40 [0] : vector<1x1x16xf32> to vector<1x16xf32>
    %cst_41 = arith.constant dense<0.000000e+00> : vector<16xf32>
    %79 = vector.multi_reduction <add>, %78, %cst_41 [0] : vector<1x16xf32> to vector<16xf32>
    %80 = vector.shape_cast %79 : vector<16xf32> to vector<1x16xf32>
    %81 = tpu.iota {dimensions = array<i32: 0>} : vector<4x16xi32>
    %c0_i32 = arith.constant 0 : i32
    %82 = vector.broadcast %c0_i32 : i32 to vector<4x16xi32>
    %83 = arith.cmpi eq, %81, %82 : vector<4x16xi32>
    %cst_42 = arith.constant 0.000000e+00 : f32
    %84 = vector.shape_cast %11 : vector<1x16xf32> to vector<1x16xf32>
    %85 = vector.broadcast %84 : vector<1x16xf32> to vector<4x16xf32>
    %86 = vector.broadcast %cst_42 : f32 to vector<4x16xf32>
    %87 = arith.select %83, %85, %86 : vector<4x16xi1>, vector<4x16xf32>
    %c1_i32_43 = arith.constant 1 : i32
    %88 = vector.broadcast %c1_i32_43 : i32 to vector<4x16xi32>
    %89 = arith.cmpi eq, %81, %88 : vector<4x16xi32>
    %cst_44 = arith.constant 0.000000e+00 : f32
    %90 = vector.shape_cast %16 : vector<1x16xf32> to vector<1x16xf32>
    %91 = vector.broadcast %90 : vector<1x16xf32> to vector<4x16xf32>
    %92 = vector.broadcast %cst_44 : f32 to vector<4x16xf32>
    %93 = arith.select %89, %91, %92 : vector<4x16xi1>, vector<4x16xf32>
    %94 = arith.addf %87, %93 : vector<4x16xf32>
    %c2_i32 = arith.constant 2 : i32
    %95 = vector.broadcast %c2_i32 : i32 to vector<4x16xi32>
    %96 = arith.cmpi eq, %81, %95 : vector<4x16xi32>
    %cst_45 = arith.constant 0.000000e+00 : f32
    %97 = vector.shape_cast %63 : vector<1x16xf32> to vector<1x16xf32>
    %98 = vector.broadcast %97 : vector<1x16xf32> to vector<4x16xf32>
    %99 = vector.broadcast %cst_45 : f32 to vector<4x16xf32>
    %100 = arith.select %96, %98, %99 : vector<4x16xi1>, vector<4x16xf32>
    %101 = arith.addf %94, %100 : vector<4x16xf32>
    %c3_i32 = arith.constant 3 : i32
    %102 = vector.broadcast %c3_i32 : i32 to vector<4x16xi32>
    %103 = arith.cmpi eq, %81, %102 : vector<4x16xi32>
    %cst_46 = arith.constant 0.000000e+00 : f32
    %104 = vector.shape_cast %80 : vector<1x16xf32> to vector<1x16xf32>
    %105 = vector.broadcast %104 : vector<1x16xf32> to vector<4x16xf32>
    %106 = vector.broadcast %cst_46 : f32 to vector<4x16xf32>
    %107 = arith.select %103, %105, %106 : vector<4x16xi1>, vector<4x16xf32>
    %108 = arith.addf %101, %107 : vector<4x16xf32>
    %109 = vector.shape_cast %108 : vector<4x16xf32> to vector<1x4x16xf32>
    %c0_47 = arith.constant 0 : index
    %c0_48 = arith.constant 0 : index
    %c0_49 = arith.constant 0 : index
    %110 = vector.load %arg4[%c0_47, %c0_48, %c0_49] : memref<1x4x16xf32, #tpu.memory_space<vmem>>, vector<1x4x16xf32>
    tpu.vector_store %arg4[%c0_47, %c0_48, %c0_49], %109 {strides = array<i32>} : memref<1x4x16xf32, #tpu.memory_space<vmem>>, vector<1x4x16xf32>,
    return
  }
  func.func @transform_0(%arg0: i32) -> (i32, i32, i32, i32) {
    %c0_i32 = arith.constant 0 : i32
    %c0_i32_0 = arith.constant 0 : i32
    %c0_i32_1 = arith.constant 0 : i32
    %c0_i32_2 = arith.constant 0 : i32
    return %arg0, %c0_i32, %c0_i32_0, %c0_i32_1 : i32, i32, i32, i32
  }
  func.func @transform_1(%arg0: i32) -> (i32, i32, i32, i32) {
    %c0_i32 = arith.constant 0 : i32
    %c0_i32_0 = arith.constant 0 : i32
    %c0_i32_1 = arith.constant 0 : i32
    %c0_i32_2 = arith.constant 0 : i32
    return %arg0, %c0_i32, %c0_i32_0, %c0_i32_1 : i32, i32, i32, i32
  }
  func.func @transform_2(%arg0: i32) -> (i32, i32, i32, i32) {
    %c0_i32 = arith.constant 0 : i32
    %c0_i32_0 = arith.constant 0 : i32
    %c0_i32_1 = arith.constant 0 : i32
    %c0_i32_2 = arith.constant 0 : i32
    return %arg0, %c0_i32, %c0_i32_0, %c0_i32_1 : i32, i32, i32, i32
  }
  func.func @transform_3(%arg0: i32) -> (i32, i32, i32) {
    %c0_i32 = arith.constant 0 : i32
    %c0_i32_0 = arith.constant 0 : i32
    %c0_i32_1 = arith.constant 0 : i32
    return %arg0, %c0_i32, %c0_i32_0 : i32, i32, i32
  }
}

</mosaic_0001>

<llo_original>
// kernel: tpu_custom_call.1
$region0: #{tpu_custom_call.1}
  #allocation0 [shape = 'u32[]', space=smem, size = 0x4, offset = 0x4, fixed_abs, tag = 'smem constant byte address 0x4 - core index']
  #allocation1 [shape = 'u32[144,128]{1,0:T(1,128)}', space=vmem, size = 0x12000, scoped, tag = 'internal scratch']
  %s0 = inlined_call_operand.hbm [shape: f32[2,4,16,16], index: 0, kind: input, shape index: {}]
  %s1 = inlined_call_operand.hbm [shape: f32[2,4,16,16], index: 1, kind: input, shape index: {}]
  %s2 = inlined_call_operand.hbm [shape: f32[2,4,16,16], index: 2, kind: input, shape index: {}]
  %s3 = inlined_call_operand.hbm [shape: f32[2,4,16], index: 3, kind: output, shape index: {}]
  %s4 = sld [smem:[#allocation0]]
  $region57: #{tpu_custom_call.1} parent=0
    _
  %s6 = ssub.s32 1, %s4
  %s7 = scalar_select 0, %s6, %s4
  $region1: #{tpu_custom_call.1} parent=0
    #allocation2 [shape = 'u8[65536]{0}', space=vmem, size = 0x10000, scoped, tag = 'input window, operand 0']
    #allocation3 [shape = 's32[2]{0}', space=sflag, size = 0x8, scoped, tag = 'scoped memory for tpu_custom_call.1']
    #allocation4 [shape = 's32[2]{0}', space=sflag, size = 0x8, scoped, tag = 'scoped memory for tpu_custom_call.1']
    #allocation5 [shape = 'u8[65536]{0}', space=vmem, size = 0x10000, scoped, tag = 'input window, operand 1']
    #allocation6 [shape = 's32[2]{0}', space=sflag, size = 0x8, scoped, tag = 'scoped memory for tpu_custom_call.1']
    #allocation7 [shape = 'u8[65536]{0}', space=vmem, size = 0x10000, scoped, tag = 'input window, operand 2']
    #allocation8 [shape = 'u8[4096]{0}', space=vmem, size = 0x1000, scoped, tag = 'output window, operand 0']
    %8 = vsyncpa [#allocation3], 0
    %s9 = scalar_lea.sflag [#allocation3], 1
    %10 = vsyncpa %s9, 0
    %11 = vsyncpa [#allocation6], 0
    %s12 = scalar_lea.sflag [#allocation6], 1
    %13 = vsyncpa %s12, 0
    %14 = vsyncpa [#allocation4], 0
    %s15 = scalar_lea.sflag [#allocation4], 1
    %16 = vsyncpa %s15, 0
    loop: start=0, step=1, limit=4
    $region2: #{tpu_custom_call.1} parent=1 // loop_pre_header
      _
    $region3: #{tpu_custom_call.1} parent=1 // loop_header
      %s18 = sphi 0, %s22
      %p19 = scmp.ge.s32.totalorder %s18, 4
      %s28 = sphi 0, %s30
      %s31 = sphi 0, %s28
      %s32 = sphi 0, %s31
      %s48 = sphi 0, %s32
      %s54 = sphi 0, %s56
      %s57 = sphi 0, %s54
      %s58 = sphi 0, %s57
      %s74 = sphi 0, %s58
      %s80 = sphi 0, %s82
      %s83 = sphi 0, %s80
      %s84 = sphi 0, %s83
      %s100 = sphi 0, %s84
      %s106 = sphi 0, %s108
      %s109 = sphi 0, %s106
      %s110 = sphi 0, %s109
      %s126 = sphi 0, %s110
    $region4: #{tpu_custom_call.1} parent=1 // loop_header_branch
      %21 = sbr.rel (%p19) target = $region8
    $region5: #{tpu_custom_call.1} parent=1 // loop_body
      %s23 = ssub.s32 %s18, 1
      %s24 = ssub.s32 %s18, 2
      %s25 = sadd.s32 %s18, 1
      %s26 = ssub.s32 %s18, %s25
      %p27 = scmp.eq.s32.totalorder %s26, 0
      %s29 = sadd.s32 %s28, 1
      %s30 = scalar_select %p27, %s28, %s29
      %p33 = pneg %p27
      %p34 = scmp.eq.s32.totalorder %s18, 1
      %p35 = por %p33, %p34
      %p36 = scmp.ne.s32.totalorder %s28, %s31
      %p37 = scmp.eq.s32.totalorder %s18, 0
      %p38 = por %p36, %p37
      %p39 = scmp.ne.s32.totalorder %s28, %s31
      %p40 = scmp.eq.s32.totalorder %s23, 1
      %p41 = por %p39, %p40
      %p42 = scmp.ne.s32.totalorder %s31, %s32
      %p43 = scmp.eq.s32.totalorder %s23, 0
      %p44 = por %p42, %p43
      %p45 = scmp.ne.s32.totalorder %s31, %s32
      %p46 = scmp.eq.s32.totalorder %s24, 1
      %p47 = por %p45, %p46
      %p49 = scmp.ne.s32.totalorder %s32, %s48
      %p50 = scmp.eq.s32.totalorder %s24, 0
      %p51 = por %p49, %p50
      %s52 = ssub.s32 %s18, %s25
      %p53 = scmp.eq.s32.totalorder %s52, 0
      %s55 = sadd.s32 %s54, 1
      %s56 = scalar_select %p53, %s54, %s55
      %p59 = pneg %p53
      %p60 = scmp.eq.s32.totalorder %s18, 1
      %p61 = por %p59, %p60
      %p62 = scmp.ne.s32.totalorder %s54, %s57
      %p63 = scmp.eq.s32.totalorder %s18, 0
      %p64 = por %p62, %p63
      %p65 = scmp.ne.s32.totalorder %s54, %s57
      %p66 = scmp.eq.s32.totalorder %s23, 1
      %p67 = por %p65, %p66
      %p68 = scmp.ne.s32.totalorder %s57, %s58
      %p69 = scmp.eq.s32.totalorder %s23, 0
      %p70 = por %p68, %p69
      %p71 = scmp.ne.s32.totalorder %s57, %s58
      %p72 = scmp.eq.s32.totalorder %s24, 1
      %p73 = por %p71, %p72
      %p75 = scmp.ne.s32.totalorder %s58, %s74
      %p76 = scmp.eq.s32.totalorder %s24, 0
      %p77 = por %p75, %p76
      %s78 = ssub.s32 %s18, %s25
      %p79 = scmp.eq.s32.totalorder %s78, 0
      %s81 = sadd.s32 %s80, 1
      %s82 = scalar_select %p79, %s80, %s81
      %p85 = pneg %p79
      %p86 = scmp.eq.s32.totalorder %s18, 1
      %p87 = por %p85, %p86
      %p88 = scmp.ne.s32.totalorder %s80, %s83
      %p89 = scmp.eq.s32.totalorder %s18, 0
      %p90 = por %p88, %p89
      %p91 = scmp.ne.s32.totalorder %s80, %s83
      %p92 = scmp.eq.s32.totalorder %s23, 1
      %p93 = por %p91, %p92
      %p94 = scmp.ne.s32.totalorder %s83, %s84
      %p95 = scmp.eq.s32.totalorder %s23, 0
      %p96 = por %p94, %p95
      %p97 = scmp.ne.s32.totalorder %s83, %s84
      %p98 = scmp.eq.s32.totalorder %s24, 1
      %p99 = por %p97, %p98
      %p101 = scmp.ne.s32.totalorder %s84, %s100
      %p102 = scmp.eq.s32.totalorder %s24, 0
      %p103 = por %p101, %p102
      %s104 = ssub.s32 %s18, %s25
      %p105 = scmp.eq.s32.totalorder %s104, 0
      %s107 = sadd.s32 %s106, 1
      %s108 = scalar_select %p105, %s106, %s107
      %p111 = pneg %p105
      %p112 = scmp.eq.s32.totalorder %s18, 1
      %p113 = por %p111, %p112
      %p114 = scmp.ne.s32.totalorder %s106, %s109
      %p115 = scmp.eq.s32.totalorder %s18, 0
      %p116 = por %p114, %p115
      %p117 = scmp.ne.s32.totalorder %s106, %s109
      %p118 = scmp.eq.s32.totalorder %s23, 1
      %p119 = por %p117, %p118
      %p120 = scmp.ne.s32.totalorder %s109, %s110
      %p121 = scmp.eq.s32.totalorder %s23, 0
      %p122 = por %p120, %p121
      %p123 = scmp.ne.s32.totalorder %s109, %s110
      %p124 = scmp.eq.s32.totalorder %s24, 1
      %p125 = por %p123, %p124
      %p127 = scmp.ne.s32.totalorder %s110, %s126
      %p128 = scmp.eq.s32.totalorder %s24, 0
      %p129 = por %p127, %p128
      %p130 = scmp.le.s32.totalorder 1, %s18
      %p131 = scmp.lt.s32.totalorder %s18, 3
      %p132 = pnand %p130, %p131
      %p133 = pneg %p132
      // Predicated region
      $region9: #{tpu_custom_call.1} parent=5 // pred_check
        _
      $region10: #{tpu_custom_call.1} parent=5 // pred_check_branch
        %135 = sbr.rel (%p132) target = $region12
      $region11: #{tpu_custom_call.1} parent=5 // pred_region
        %s136 = ssub.s32 %s18, 1
      $region12: #{tpu_custom_call.1} parent=5 // pred_fallthru
        _
      %p137 = scmp.lt.s32.totalorder %s18, 2
      // Predicated region
      $region13: #{tpu_custom_call.1} parent=5 // pred_check
        %p138 = pneg %p137
      $region14: #{tpu_custom_call.1} parent=5 // pred_check_branch
        %140 = sbr.rel (%p138) target = $region16
      $region15: #{tpu_custom_call.1} parent=5 // pred_region
        // Predicated region
        $region17: #{tpu_custom_call.1} parent=15 // pred_check
          %p141 = pneg %p38
        $region18: #{tpu_custom_call.1} parent=15 // pred_check_branch
          %143 = sbr.rel (%p141) target = $region20
        $region19: #{tpu_custom_call.1} parent=15 // pred_region
          %s144 = sand.u32 %s28, 1
          %s145 = scalar_lea.sflag [#allocation3], %s144
          %s146 = sand.u32 %s28, 1
          %s147 = smul.addr %s146, 64
          %s148 = scalar_lea.vmem [#allocation2], %s147
          %s150 = ssub.s32 1024, 1024
          %151 = vsyncadd %s145, %s150
          %s152 = smul.addr %s18, 8
          %s153 = smul.addr %s152, 128
          %s154 = scalar_lea.hbm %s0, %s153
          %s155 = sshll.u32 %s148, 4
          %s156 = int_to_ptr.vmem [resolvable:$true] %s155
          %161 = dma.hbm_to_vmem [thread:$0]  %s154, 1024, %s156, %s145, 128, 128, 8
        $region20: #{tpu_custom_call.1} parent=15 // pred_fallthru
          _
        // Predicated region
        $region21: #{tpu_custom_call.1} parent=15 // pred_check
          %p162 = pneg %p64
        $region22: #{tpu_custom_call.1} parent=15 // pred_check_branch
          %164 = sbr.rel (%p162) target = $region24
        $region23: #{tpu_custom_call.1} parent=15 // pred_region
          %s165 = sand.u32 %s18, 1
          %s166 = scalar_lea.sflag [#allocation6], %s165
          %s167 = sand.u32 %s54, 1
          %s168 = smul.addr %s167, 64
          %s169 = scalar_lea.vmem [#allocation5], %s168
          %s171 = ssub.s32 1024, 1024
          %172 = vsyncadd %s166, %s171
          %s173 = smul.addr %s18, 8
          %s174 = smul.addr %s173, 128
          %s175 = scalar_lea.hbm %s1, %s174
          %s176 = sshll.u32 %s169, 4
          %s177 = int_to_ptr.vmem [resolvable:$true] %s176
          %182 = dma.hbm_to_vmem [thread:$0]  %s175, 1024, %s177, %s166, 128, 128, 8
        $region24: #{tpu_custom_call.1} parent=15 // pred_fallthru
          _
        // Predicated region
        $region25: #{tpu_custom_call.1} parent=15 // pred_check
          %p183 = pneg %p90
        $region26: #{tpu_custom_call.1} parent=15 // pred_check_branch
          %185 = sbr.rel (%p183) target = $region28
        $region27: #{tpu_custom_call.1} parent=15 // pred_region
          %s186 = sand.u32 %s18, 1
          %s187 = scalar_lea.sflag [#allocation6], %s186
          %s188 = sand.u32 %s80, 1
          %s189 = smul.addr %s188, 64
          %s190 = scalar_lea.vmem [#allocation7], %s189
          %s192 = ssub.s32 1024, 1024
          %193 = vsyncadd %s187, %s192
          %s194 = smul.addr %s18, 8
          %s195 = smul.addr %s194, 128
          %s196 = scalar_lea.hbm %s2, %s195
          %s197 = sshll.u32 %s190, 4
          %s198 = int_to_ptr.vmem [resolvable:$true] %s197
          %203 = dma.hbm_to_vmem [thread:$0]  %s196, 1024, %s198, %s187, 128, 128, 8
        $region28: #{tpu_custom_call.1} parent=15 // pred_fallthru
          _
      $region16: #{tpu_custom_call.1} parent=5 // pred_fallthru
        _
      %p204 = scmp.le.s32.totalorder 1, %s18
      %p205 = scmp.lt.s32.totalorder %s18, 3
      %p206 = pnand %p204, %p205
      %p207 = pneg %p206
      // Predicated region
      $region29: #{tpu_custom_call.1} parent=5 // pred_check
        _
      $region30: #{tpu_custom_call.1} parent=5 // pred_check_branch
        %209 = sbr.rel (%p206) target = $region32
      $region31: #{tpu_custom_call.1} parent=5 // pred_region
        %s210 = ssub.s32 %s18, 1
        %s211 = sand.u32 %s31, 1
        %s212 = scalar_lea.sflag [#allocation3], %s211
        %s213 = sand.u32 %s31, 1
        %s214 = smul.addr %s213, 64
        %s215 = scalar_lea.vmem [#allocation2], %s214
        // Predicated region
        $region33: #{tpu_custom_call.1} parent=31 // pred_check
          %p216 = pneg %p44
        $region34: #{tpu_custom_call.1} parent=31 // pred_check_branch
          %218 = sbr.rel (%p216) target = $region36
        $region35: #{tpu_custom_call.1} parent=31 // pred_region
          %219 = dma.done %s212, 1024
        $region36: #{tpu_custom_call.1} parent=31 // pred_fallthru
          _
        %s220 = sand.u32 %s23, 1
        %s221 = scalar_lea.sflag [#allocation6], %s220
        %s222 = sand.u32 %s57, 1
        %s223 = smul.addr %s222, 64
        %s224 = scalar_lea.vmem [#allocation5], %s223
        // Predicated region
        $region37: #{tpu_custom_call.1} parent=31 // pred_check
          %p225 = pneg %p70
        $region38: #{tpu_custom_call.1} parent=31 // pred_check_branch
          %227 = sbr.rel (%p225) target = $region40
        $region39: #{tpu_custom_call.1} parent=31 // pred_region
          %228 = dma.done %s221, 1024
        $region40: #{tpu_custom_call.1} parent=31 // pred_fallthru
          _
        %s229 = sand.u32 %s23, 1
        %s230 = scalar_lea.sflag [#allocation6], %s229
        %s231 = sand.u32 %s83, 1
        %s232 = smul.addr %s231, 64
        %s233 = scalar_lea.vmem [#allocation7], %s232
        // Predicated region
        $region41: #{tpu_custom_call.1} parent=31 // pred_check
          %p234 = pneg %p96
        $region42: #{tpu_custom_call.1} parent=31 // pred_check_branch
          %236 = sbr.rel (%p234) target = $region44
        $region43: #{tpu_custom_call.1} parent=31 // pred_region
          %237 = dma.done %s230, 1024
        $region44: #{tpu_custom_call.1} parent=31 // pred_fallthru
          _
        %s238 = sand.u32 %s31, 1
        %s239 = scalar_lea.sflag [#allocation3], %s238
        %s240 = sand.u32 %s31, 1
        %s241 = smul.addr %s240, 64
        %s242 = scalar_lea.vmem [#allocation2], %s241
        %p243 = pneg %p44
        %p244 = pneg %p41
        %s245 = sand.u32 %s23, 1
        %s246 = scalar_lea.sflag [#allocation6], %s245
        %s247 = sand.u32 %s57, 1
        %s248 = smul.addr %s247, 64
        %s249 = scalar_lea.vmem [#allocation5], %s248
        %p250 = pneg %p70
        %p251 = pneg %p67
        %s252 = sand.u32 %s23, 1
        %s253 = scalar_lea.sflag [#allocation6], %s252
        %s254 = sand.u32 %s83, 1
        %s255 = smul.addr %s254, 64
        %s256 = scalar_lea.vmem [#allocation7], %s255
        %p257 = pneg %p96
        %p258 = pneg %p93
        %p259 = pneg %p122
        %p260 = pneg %p119
        %s261 = sand.u32 %s109, 1
        %s262 = scalar_lea.sflag [#allocation4], %s261
        %s263 = sand.u32 %s109, 1
        %s264 = smul.addr %s263, 4
        %s265 = scalar_lea.vmem [#allocation8], %s264
        %v266 = vld [vmem:[%s215] sm:$0xff]
        %v267 = vld [vmem:[%s215 + $0x8] sm:$0xff]
        %v268 = vld [vmem:[%s215 + $0x10] sm:$0xff]
        %v269 = vld [vmem:[%s215 + $0x18] sm:$0xff]
        %v270 = vld [vmem:[%s215 + $0x20] sm:$0xff]
        %v271 = vld [vmem:[%s215 + $0x28] sm:$0xff]
        %v272 = vld [vmem:[%s215 + $0x30] sm:$0xff]
        %v273 = vld [vmem:[%s215 + $0x38] sm:$0xff]
        %v274 = vld [vmem:[%s224] sm:$0xff]
        %v275 = vld [vmem:[%s224 + $0x8] sm:$0xff]
        %v276 = vld [vmem:[%s224 + $0x10] sm:$0xff]
        %v277 = vld [vmem:[%s224 + $0x18] sm:$0xff]
        %v278 = vld [vmem:[%s224 + $0x20] sm:$0xff]
        %v279 = vld [vmem:[%s224 + $0x28] sm:$0xff]
        %v280 = vld [vmem:[%s224 + $0x30] sm:$0xff]
        %v281 = vld [vmem:[%s224 + $0x38] sm:$0xff]
        %v282 = vld [vmem:[%s233] sm:$0xff]
        %v283 = vld [vmem:[%s233 + $0x8] sm:$0xff]
        %v284 = vld [vmem:[%s233 + $0x10] sm:$0xff]
        %v285 = vld [vmem:[%s233 + $0x18] sm:$0xff]
        %v286 = vld [vmem:[%s233 + $0x20] sm:$0xff]
        %v287 = vld [vmem:[%s233 + $0x28] sm:$0xff]
        %v288 = vld [vmem:[%s233 + $0x30] sm:$0xff]
        %v289 = vld [vmem:[%s233 + $0x38] sm:$0xff]
        %v290 = vsub.f32 %v274, %v266
        %v291 = vsub.f32 %v275, %v267
        %v292 = vsub.f32 %v276, %v268
        %v293 = vsub.f32 %v277, %v269
        %v294 = vsub.f32 %v278, %v270
        %v295 = vsub.f32 %v279, %v271
        %v296 = vsub.f32 %v280, %v272
        %v297 = vsub.f32 %v281, %v273
        %v298 = vand.u32 2147483647, %v290
        %v299 = vand.u32 2147483647, %v291
        %v300 = vand.u32 2147483647, %v292
        %v301 = vand.u32 2147483647, %v293
        %v302 = vand.u32 2147483647, %v294
        %v303 = vand.u32 2147483647, %v295
        %v304 = vand.u32 2147483647, %v296
        %v305 = vand.u32 2147483647, %v297
        %v306 = vsub.f32 1.0, %v282
        %v307 = vsub.f32 1.0, %v283
        %v308 = vsub.f32 1.0, %v284
        %v309 = vsub.f32 1.0, %v285
        %v310 = vsub.f32 1.0, %v286
        %v311 = vsub.f32 1.0, %v287
        %v312 = vsub.f32 1.0, %v288
        %v313 = vsub.f32 1.0, %v289
        %v314 = vmul.f32 %v306, %v298
        %v315 = vmul.f32 %v307, %v299
        %v316 = vmul.f32 %v308, %v300
        %v317 = vmul.f32 %v309, %v301
        %v318 = vmul.f32 %v310, %v302
        %v319 = vmul.f32 %v311, %v303
        %v320 = vmul.f32 %v312, %v304
        %v321 = vmul.f32 %v313, %v305
        %v322 = vadd.f32 %v314, 0.0
        %v323 = vadd.f32 %v315, 0.0
        %v324 = vadd.f32 %v316, 0.0
        %v325 = vadd.f32 %v317, 0.0
        %v326 = vadd.f32 %v318, 0.0
        %v327 = vadd.f32 %v319, 0.0
        %v328 = vadd.f32 %v320, 0.0
        %v329 = vadd.f32 %v321, 0.0
        %vm330 = vcmask 130048
        %v331 = vsel %vm330, %v322, 0.0
        %v332 = vsel %vm330, %v324, 0.0
        %v333 = vadd.f32 %v331, %v332
        %v334 = vsel %vm330, %v326, 0.0
        %v335 = vadd.f32 %v333, %v334
        %v336 = vsel %vm330, %v328, 0.0
        %v337 = vadd.f32 %v335, %v336
        %v338 = vsel %vm330, %v323, 0.0
        %v339 = vsel %vm330, %v325, 0.0
        %v340 = vadd.f32 %v338, %v339
        %v341 = vsel %vm330, %v327, 0.0
        %v342 = vadd.f32 %v340, %v341
        %v343 = vsel %vm330, %v329, 0.0
        %v344 = vadd.f32 %v342, %v343
        %v345 = vsel %vm330, %v337, 0.0
        %v346 = vsel %vm330, %v344, 0.0
        %v347 = vadd.f32 %v345, %v346
        %v348 = vrot.slane %v347, 4
        %v349 = vadd.f32 %v347, %v348
        %v350 = vrot.slane %v349, 2
        %v351 = vadd.f32 %v349, %v350
        %v352 = vrot.slane %v351, 1
        %v353 = vadd.f32 %v351, %v352
        %v354 = vadd.f32 %v298, 0.0
        %v355 = vadd.f32 %v299, 0.0
        %v356 = vadd.f32 %v300, 0.0
        %v357 = vadd.f32 %v301, 0.0
        %v358 = vadd.f32 %v302, 0.0
        %v359 = vadd.f32 %v303, 0.0
        %v360 = vadd.f32 %v304, 0.0
        %v361 = vadd.f32 %v305, 0.0
        %v362 = vsel %vm330, %v354, 0.0
        %v363 = vsel %vm330, %v356, 0.0
        %v364 = vadd.f32 %v362, %v363
        %v365 = vsel %vm330, %v358, 0.0
        %v366 = vadd.f32 %v364, %v365
        %v367 = vsel %vm330, %v360, 0.0
        %v368 = vadd.f32 %v366, %v367
        %v369 = vsel %vm330, %v355, 0.0
        %v370 = vsel %vm330, %v357, 0.0
        %v371 = vadd.f32 %v369, %v370
        %v372 = vsel %vm330, %v359, 0.0
        %v373 = vadd.f32 %v371, %v372
        %v374 = vsel %vm330, %v361, 0.0
        %v375 = vadd.f32 %v373, %v374
        %v376 = vsel %vm330, %v368, 0.0
        %v377 = vsel %vm330, %v375, 0.0
        %v378 = vadd.f32 %v376, %v377
        %v379 = vrot.slane %v378, 4
        %v380 = vadd.f32 %v378, %v379
        %v381 = vrot.slane %v380, 2
        %v382 = vadd.f32 %v380, %v381
        %v383 = vrot.slane %v382, 1
        %v384 = vadd.f32 %v382, %v383
        %v385 = vsub.f32 %v384, %v353
        %v386 = vmul.f32 %v306, %v290
        %v387 = vmul.f32 %v307, %v291
        %v388 = vmul.f32 %v308, %v292
        %v389 = vmul.f32 %v309, %v293
        %v390 = vmul.f32 %v310, %v294
        %v391 = vmul.f32 %v311, %v295
        %v392 = vmul.f32 %v312, %v296
        %v393 = vmul.f32 %v313, %v297
        %v394 = vadd.f32 %v266, %v386
        %v395 = vadd.f32 %v267, %v387
        %v396 = vadd.f32 %v268, %v388
        %v397 = vadd.f32 %v269, %v389
        %v398 = vadd.f32 %v270, %v390
        %v399 = vadd.f32 %v271, %v391
        %v400 = vadd.f32 %v272, %v392
        %v401 = vadd.f32 %v273, %v393
        %v402 = vsel %vm330, %v306, 0.0
        %v403 = vsel %vm330, %v308, 0.0
        %v404 = vadd.f32 %v402, %v403
        %v405 = vsel %vm330, %v310, 0.0
        %v406 = vadd.f32 %v404, %v405
        %v407 = vsel %vm330, %v312, 0.0
        %v408 = vadd.f32 %v406, %v407
        %v409 = vsel %vm330, %v307, 0.0
        %v410 = vsel %vm330, %v309, 0.0
        %v411 = vadd.f32 %v409, %v410
        %v412 = vsel %vm330, %v311, 0.0
        %v413 = vadd.f32 %v411, %v412
        %v414 = vsel %vm330, %v313, 0.0
        %v415 = vadd.f32 %v413, %v414
        %v416 = vlaneseq
        %v417 = vshrl.u32 %v416, 7
        %v418 = vadd.s32 %v417, 8
        %v419 = vlaneseq
        %v420 = vand.u32 %v419, 127
        %vm421 = vcmp.ge.s32.totalorder %v417, 1
        %vm422 = vcmp.ge.s32.totalorder %v418, 1
        %v423 = vrot.slane %v408, 7
        %v424 = vrot.slane %v415, 7
        %vm425 = vcmp.lt.s32.totalorder %v417, 1
        %v426 = vsel %vm425, %v423, %v424
        %v427 = vsel %vm425, %v424, %v423
        %v428 = vsel %vm421, %v427, 0.0
        %v429 = vsel %vm422, %v426, 0.0
        %vm430 = vcmp.le.s32.totalorder %v417, 14
        %vm431 = vcmp.le.s32.totalorder %v418, 14
        %v432 = vrot.slane %v408, 1
        %v433 = vrot.slane %v415, 1
        %vm434 = vcmp.lt.s32.totalorder %v417, 7
        %v435 = vsel %vm434, %v432, %v433
        %v436 = vsel %vm434, %v433, %v432
        %v437 = vsel %vm430, %v435, 0.0
        %v438 = vsel %vm431, %v436, 0.0
        %v439 = vadd.f32 %v408, %v428
        %v440 = vadd.f32 %v415, %v429
        %v441 = vadd.f32 %v439, %v437
        %v442 = vadd.f32 %v440, %v438
        %vm443 = vcmp.ge.s32.totalorder %v420, 1
        %vm444 = vcmask 1047680
        %445 = vrot.lane.b32.xlu0 %v441, 16
        %v446 = vpop.permute.xlu0 %445
        %v447 = vsel %vm444, %v446, %v441
        %448 = vrot.lane.b32.xlu0 %v442, 16
        %v449 = vpop.permute.xlu0 %448
        %v450 = vsel %vm444, %v449, %v442
        %451 = vrot.lane.b32.xlu0 %v447, 16
        %v452 = vpop.permute.xlu0 %451
        %453 = vrot.lane.b32.xlu0 %v450, 16
        %v454 = vpop.permute.xlu0 %453
        %v455 = vsel %vm444, %v452, %v441
        %v456 = vsel %vm444, %v454, %v442
        %459 = vrot.lane.b32.xlu0 %v455, 113
        %v460 = vpop.permute.xlu0 %459
        %461 = vrot.lane.b32.xlu0 %v456, 113
        %v462 = vpop.permute.xlu0 %461
        %v465 = vsel %vm443, %v460, 0.0
        %v466 = vsel %vm443, %v462, 0.0
        %vm467 = vcmp.le.s32.totalorder %v420, 14
        %468 = vrot.lane.b32.xlu0 %v455, 127
        %v469 = vpop.permute.xlu0 %468
        %470 = vrot.lane.b32.xlu0 %v456, 127
        %v471 = vpop.permute.xlu0 %470
        %v474 = vsel %vm467, %v469, 0.0
        %v475 = vsel %vm467, %v471, 0.0
        %v476 = vadd.f32 %v441, %v465
        %v477 = vadd.f32 %v442, %v466
        %v478 = vadd.f32 %v476, %v474
        %v479 = vadd.f32 %v477, %v475
        %vm480 = vcmp.ne.f32.partialorder %v478, 0.0
        %vm481 = vcmp.ne.f32.partialorder %v479, 0.0
        %v482 = vsel %vm480, 1, 0
        %v483 = vsel %vm481, 1, 0
        %v484 = vcvt.s32.f32 %v482
        %v485 = vcvt.s32.f32 %v483
        %486 = vrot.lane.b32.xlu0 %v394, 16
        %v487 = vpop.permute.xlu0 %486
        %v488 = vsel %vm444, %v487, %v394
        %489 = vrot.lane.b32.xlu0 %v395, 16
        %v490 = vpop.permute.xlu0 %489
        %v491 = vsel %vm444, %v490, %v395
        %492 = vrot.lane.b32.xlu0 %v396, 16
        %v493 = vpop.permute.xlu0 %492
        %v494 = vsel %vm444, %v493, %v396
        %495 = vrot.lane.b32.xlu0 %v397, 16
        %v496 = vpop.permute.xlu0 %495
        %v497 = vsel %vm444, %v496, %v397
        %498 = vrot.lane.b32.xlu0 %v398, 16
        %v499 = vpop.permute.xlu0 %498
        %v500 = vsel %vm444, %v499, %v398
        %501 = vrot.lane.b32.xlu0 %v399, 16
        %v502 = vpop.permute.xlu0 %501
        %v503 = vsel %vm444, %v502, %v399
        %504 = vrot.lane.b32.xlu0 %v400, 16
        %v505 = vpop.permute.xlu0 %504
        %v506 = vsel %vm444, %v505, %v400
        %507 = vrot.lane.b32.xlu0 %v401, 16
        %v508 = vpop.permute.xlu0 %507
        %v509 = vsel %vm444, %v508, %v401
        %510 = vrot.lane.b32.xlu0 %v488, 16
        %v511 = vpop.permute.xlu0 %510
        %512 = vrot.lane.b32.xlu0 %v491, 16
        %v513 = vpop.permute.xlu0 %512
        %514 = vrot.lane.b32.xlu0 %v494, 16
        %v515 = vpop.permute.xlu0 %514
        %516 = vrot.lane.b32.xlu0 %v497, 16
        %v517 = vpop.permute.xlu0 %516
        %518 = vrot.lane.b32.xlu0 %v500, 16
        %v519 = vpop.permute.xlu0 %518
        %520 = vrot.lane.b32.xlu0 %v503, 16
        %v521 = vpop.permute.xlu0 %520
        %522 = vrot.lane.b32.xlu0 %v506, 16
        %v523 = vpop.permute.xlu0 %522
        %524 = vrot.lane.b32.xlu0 %v509, 16
        %v525 = vpop.permute.xlu0 %524
        %v526 = vsel %vm444, %v511, %v394
        %v527 = vsel %vm444, %v513, %v395
        %v528 = vsel %vm444, %v515, %v396
        %v529 = vsel %vm444, %v517, %v397
        %v530 = vsel %vm444, %v519, %v398
        %v531 = vsel %vm444, %v521, %v399
        %v532 = vsel %vm444, %v523, %v400
        %v533 = vsel %vm444, %v525, %v401
        %542 = vrot.lane.b32.xlu0 %v394, 1
        %v543 = vpop.permute.xlu0 %542
        %544 = vrot.lane.b32.xlu0 %v395, 1
        %v545 = vpop.permute.xlu0 %544
        %546 = vrot.lane.b32.xlu0 %v396, 1
        %v547 = vpop.permute.xlu0 %546
        %548 = vrot.lane.b32.xlu0 %v397, 1
        %v549 = vpop.permute.xlu0 %548
        %550 = vrot.lane.b32.xlu0 %v398, 1
        %v551 = vpop.permute.xlu0 %550
        %552 = vrot.lane.b32.xlu0 %v399, 1
        %v553 = vpop.permute.xlu0 %552
        %554 = vrot.lane.b32.xlu0 %v400, 1
        %v555 = vpop.permute.xlu0 %554
        %556 = vrot.lane.b32.xlu0 %v401, 1
        %v557 = vpop.permute.xlu0 %556
        %v566 = vsub.f32 %v526, %v543
        %v567 = vsub.f32 %v527, %v545
        %v568 = vsub.f32 %v528, %v547
        %v569 = vsub.f32 %v529, %v549
        %v570 = vsub.f32 %v530, %v551
        %v571 = vsub.f32 %v531, %v553
        %v572 = vsub.f32 %v532, %v555
        %v573 = vsub.f32 %v533, %v557
        %v574 = vand.u32 2147483647, %v566
        %v575 = vand.u32 2147483647, %v567
        %v576 = vand.u32 2147483647, %v568
        %v577 = vand.u32 2147483647, %v569
        %v578 = vand.u32 2147483647, %v570
        %v579 = vand.u32 2147483647, %v571
        %v580 = vand.u32 2147483647, %v572
        %v581 = vand.u32 2147483647, %v573
        %vm582 = vcmask 138248
        %v583 = vsel %vm582, %v574, 0.0
        %v584 = vsel %vm582, %v576, 0.0
        %v585 = vadd.f32 %v583, %v584
        %v586 = vsel %vm582, %v578, 0.0
        %v587 = vadd.f32 %v585, %v586
        %v588 = vsel %vm582, %v580, 0.0
        %v589 = vadd.f32 %v587, %v588
        %v590 = vsel %vm582, %v575, 0.0
        %v591 = vsel %vm582, %v577, 0.0
        %v592 = vadd.f32 %v590, %v591
        %v593 = vsel %vm582, %v579, 0.0
        %v594 = vadd.f32 %v592, %v593
        %v595 = vsel %vm582, %v581, 0.0
        %v596 = vadd.f32 %v594, %v595
        %597 = vrot.lane.b32.xlu0 %v484, 16
        %v598 = vpop.permute.xlu0 %597
        %v599 = vsel %vm444, %v598, %v484
        %600 = vrot.lane.b32.xlu0 %v485, 16
        %v601 = vpop.permute.xlu0 %600
        %v602 = vsel %vm444, %v601, %v485
        %603 = vrot.lane.b32.xlu0 %v599, 16
        %v604 = vpop.permute.xlu0 %603
        %605 = vrot.lane.b32.xlu0 %v602, 16
        %v606 = vpop.permute.xlu0 %605
        %v607 = vsel %vm444, %v604, %v484
        %v608 = vsel %vm444, %v606, %v485
        %611 = vrot.lane.b32.xlu0 %v484, 1
        %v612 = vpop.permute.xlu0 %611
        %613 = vrot.lane.b32.xlu0 %v485, 1
        %v614 = vpop.permute.xlu0 %613
        %v617 = vmul.f32 %v607, %v612
        %v618 = vmul.f32 %v608, %v614
        %v619 = vmul.f32 %v617, %v589
        %v620 = vmul.f32 %v618, %v596
        %623 = vrot.lane.b32.xlu0 %v619, 127
        %v624 = vpop.permute.xlu0 %623
        %625 = vrot.lane.b32.xlu0 %v620, 127
        %v626 = vpop.permute.xlu0 %625
        %v629 = vsel %vm467, %v624, 0.0
        %v630 = vsel %vm467, %v626, 0.0
        %v631 = vadd.f32 %v629, 0.0
        %v632 = vadd.f32 %v630, 0.0
        %v633 = vsel %vm330, %v631, 0.0
        %v634 = vsel %vm330, %v632, 0.0
        %v635 = vadd.f32 %v633, %v634
        %v636 = vrot.slane %v635, 4
        %v637 = vadd.f32 %v635, %v636
        %v638 = vrot.slane %v637, 2
        %v639 = vadd.f32 %v637, %v638
        %v640 = vrot.slane %v639, 1
        %v641 = vadd.f32 %v639, %v640
        %v642 = vrot.slane %v484, 1
        %v643 = vrot.slane %v485, 1
        %v644 = vsel %vm434, %v642, %v643
        %v645 = vsel %vm434, %v643, %v642
        %v646 = vmul.f32 %v644, %v484
        %v647 = vmul.f32 %v645, %v485
        %v648 = vsel %vm430, %v646, 0.0
        %v649 = vsel %vm431, %v647, 0.0
        %v650 = vsel %vm330, %v648, 0.0
        %v651 = vsel %vm330, %v649, 0.0
        %v652 = vadd.f32 %v650, %v651
        %v653 = vrot.slane %v652, 4
        %v654 = vadd.f32 %v652, %v653
        %v655 = vrot.slane %v654, 2
        %v656 = vadd.f32 %v654, %v655
        %v657 = vrot.slane %v656, 1
        %v658 = vadd.f32 %v656, %v657
        %v659 = vrot.slane %v395, 7
        %v660 = vrot.slane %v397, 7
        %v661 = vrot.slane %v399, 7
        %v662 = vrot.slane %v401, 7
        %v667 = vsub.f32 %v394, %v659
        %v668 = vsub.f32 %v396, %v660
        %v669 = vsub.f32 %v398, %v661
        %v670 = vsub.f32 %v400, %v662
        %v671 = vand.u32 2147483647, %v667
        %v672 = vand.u32 2147483647, %v668
        %v673 = vand.u32 2147483647, %v669
        %v674 = vand.u32 2147483647, %v670
        %vm675 = vcmask 122880
        %v676 = vsel %vm675, %v671, 0.0
        %v677 = vsel %vm675, %v672, 0.0
        %v678 = vadd.f32 %v676, %v677
        %v679 = vsel %vm675, %v673, 0.0
        %v680 = vadd.f32 %v678, %v679
        %v681 = vsel %vm675, %v674, 0.0
        %v682 = vadd.f32 %v680, %v681
        %v683 = vmul.f32 %v658, %v682
        %v684 = vadd.f32 %v683, 0.0
        %v685 = vadd.f32 %v684, 0.0
        %vm686 = vcmp.eq.s32.totalorder %v417, 0
        %v687 = vsel %vm686, %v353, 0.0
        %vm688 = vcmp.eq.s32.totalorder %v417, 1
        %v689 = vsel %vm688, %v385, 0.0
        %v690 = vadd.f32 %v687, %v689
        %vm691 = vcmp.eq.s32.totalorder %v417, 2
        %v692 = vsel %vm691, %v641, 0.0
        %v693 = vadd.f32 %v690, %v692
        %vm694 = vcmp.eq.s32.totalorder %v417, 3
        %v695 = vlaneseq
        %v696 = vshrl.u32 %v695, 7
        %v697 = vsub.s32 0, %v696
        %v698 = vrot.slane %v685, %v697
        %v699 = vsel %vm694, %v698, 0.0
        %v700 = vadd.f32 %v693, %v699
        %vm701 = vcmask 125952
        %702 = vst.msk [vmem:[%s265] sm:$0xf] %vm701, %v700
        %s703 = sand.u32 %s109, 1
        %s704 = scalar_lea.sflag [#allocation4], %s703
        %s705 = sand.u32 %s109, 1
        %s706 = smul.addr %s705, 4
        %s707 = scalar_lea.vmem [#allocation8], %s706
        // Predicated region
        $region45: #{tpu_custom_call.1} parent=31 // pred_check
          %p708 = pneg %p119
        $region46: #{tpu_custom_call.1} parent=31 // pred_check_branch
          %710 = sbr.rel (%p708) target = $region48
        $region47: #{tpu_custom_call.1} parent=31 // pred_region
          %s712 = ssub.s32 64, 64
          %713 = vsyncadd %s704, %s712
          %s714 = smul.addr %s23, 64
          %s715 = scalar_lea.hbm %s3, %s714
          %s717 = sshll.u32 %s707, 4
          %s718 = int_to_ptr.vmem [resolvable:$true] %s717
          %720 = dma.vmem_to_hbm [thread:$0]  %s718, 64, %s715, %s704
        $region48: #{tpu_custom_call.1} parent=31 // pred_fallthru
          _
      $region32: #{tpu_custom_call.1} parent=5 // pred_fallthru
        _
      %p721 = scmp.le.s32.totalorder 2, %s18
      // Predicated region
      $region49: #{tpu_custom_call.1} parent=5 // pred_check
        %p722 = pneg %p721
      $region50: #{tpu_custom_call.1} parent=5 // pred_check_branch
        %724 = sbr.rel (%p722) target = $region52
      $region51: #{tpu_custom_call.1} parent=5 // pred_region
        %s725 = ssub.s32 %s18, 2
        // Predicated region
        $region53: #{tpu_custom_call.1} parent=51 // pred_check
          %p726 = pneg %p125
        $region54: #{tpu_custom_call.1} parent=51 // pred_check_branch
          %728 = sbr.rel (%p726) target = $region56
        $region55: #{tpu_custom_call.1} parent=51 // pred_region
          %s729 = sand.u32 %s110, 1
          %s730 = scalar_lea.sflag [#allocation4], %s729
          %s731 = sand.u32 %s110, 1
          %s732 = smul.addr %s731, 4
          %s733 = scalar_lea.vmem [#allocation8], %s732
          %734 = dma.done %s730, 64
        $region56: #{tpu_custom_call.1} parent=51 // pred_fallthru
          _
      $region52: #{tpu_custom_call.1} parent=5 // pred_fallthru
        _
    $region6: #{tpu_custom_call.1} parent=1 // loop_footer
      %s22 = sadd.s32 1, %s18
    $region7: #{tpu_custom_call.1} parent=1 // loop_footer_branch
      %17 = sbr.rel target = $region3
    $region8: #{tpu_custom_call.1} parent=1 // loop_exit
      _
    %735 = vsyncpa [#allocation3], 1
    %s736 = scalar_lea.sflag [#allocation3], 1
    %737 = vsyncpa %s736, 1
    %738 = vsyncpa [#allocation6], 1
    %s739 = scalar_lea.sflag [#allocation6], 1
    %740 = vsyncpa %s739, 1
    %741 = vsyncpa [#allocation4], 1
    %s742 = scalar_lea.sflag [#allocation4], 1
    %743 = vsyncpa %s742, 1

</llo_original>
